<compile_context>
chip_gen: v7x
topology: tpu7x:2x2x1
jax: 0.10.0
libtpu: 0.0.40
codegen_flags: <defaults>
</compile_context>

<pallas_src>
import functools

import jax
import jax.numpy as jnp
import numpy as np
from jax import lax
from jax.experimental import pallas as pl
from jax.experimental.pallas import tpu as pltpu

EPS_L2 = 1e-12
_CORR_TILE_ROWS = 512  # rows of f per grid step (keeps VMEM use ~5.5 MB at D=768)


def _round_up(x, m):
    return ((x + m - 1) // m) * m


# --------------------------------------------------------------------------
# Kernel 1: prompt-key mean over length, L2 normalize keys + queries,
#           similarity matmul (B,D) x (P,D)^T -> (B,P).  Single small launch;
#           emits prompt_norm / x_embed_norm so no extra passes are needed.
# --------------------------------------------------------------------------
def _sim_kernel(x_ref, prompt_ref, sim_ref, pnorm_ref, xnorm_ref):
    x = x_ref[...].astype(jnp.float32)            # (B, D)
    prompt = prompt_ref[...].astype(jnp.float32)  # (P, L, D)

    # prompt_key = prompt.mean(dim=1)
    pkey = jnp.mean(prompt, axis=1)               # (P, D)

    # l2_normalize(prompt_key, dim=1)
    p_ss = jnp.sum(pkey * pkey, axis=1, keepdims=True)
    pnorm = pkey * lax.rsqrt(jnp.maximum(p_ss, EPS_L2))

    # l2_normalize(x_embed, dim=1)
    x_ss = jnp.sum(x * x, axis=1, keepdims=True)
    xnorm = x * lax.rsqrt(jnp.maximum(x_ss, EPS_L2))

    # similarity = x_embed_norm @ prompt_norm.T  (contract on embed_dim)
    sim = lax.dot_general(xnorm, pnorm, (((1,), (1,)), ((), ())),
                          preferred_element_type=jnp.float32)

    sim_ref[...] = sim
    pnorm_ref[...] = pnorm
    xnorm_ref[...] = xnorm


# --------------------------------------------------------------------------
# Kernel 2: streamed Barlow-Twins style correlation loss.
#   Grid over row tiles of f (zero-padded rows contribute nothing).
#   Accumulates:  G = f^T f   (D,D),  s1 = sum_n f  (1,D),  s2 = sum_n f^2  (1,D)
#   Finalize:     c = (G - N mu_i mu_j) / (N std_i std_j)
#                 loss = mean((diag(c)-1)^2) + 0.005 * mean(offdiag(c)^2)
# --------------------------------------------------------------------------
def _corr_kernel(f_ref, loss_ref, gram_ref, s1_ref, s2_ref, *, n_rows, d):
    @pl.when(pl.program_id(0) == 0)
    def _init():
        gram_ref[...] = jnp.zeros_like(gram_ref)
        s1_ref[...] = jnp.zeros_like(s1_ref)
        s2_ref[...] = jnp.zeros_like(s2_ref)

    f = f_ref[...].astype(jnp.float32)            # (TILE_N, D); padded rows are zero
    gram_ref[...] += lax.dot_general(f, f, (((0,), (0,)), ((), ())),
                                     preferred_element_type=jnp.float32)
    s1_ref[...] += jnp.sum(f, axis=0, keepdims=True)
    s2_ref[...] += jnp.sum(f * f, axis=0, keepdims=True)

    @pl.when(pl.program_id(0) == pl.num_programs(0) - 1)
    def _finalize():
        n = float(n_rows)
        inv_n = 1.0 / n
        # torch.std(dim=0) is unbiased (N-1); guard N==1 (torch would give NaN)
        inv_nm1 = 1.0 / float(max(n_rows - 1, 1))

        mu = s1_ref[...] * inv_n                                   # (1, D)
        var = (s2_ref[...] - n * mu * mu) * inv_nm1
        std = jnp.sqrt(jnp.maximum(var, 0.0)) + 1e-6               # (1, D)

        mu_b = jnp.broadcast_to(mu, (d, d))                        # mu_b[i, j] = mu_j
        std_b = jnp.broadcast_to(std, (d, d))
        outer_mu = jnp.transpose(mu_b) * mu_b                      # mu_i * mu_j
        outer_std = jnp.transpose(std_b) * std_b                   # std_i * std_j

        # centered Gram -> correlation matrix
        c = (gram_ref[...] - n * outer_mu) / (outer_std * n)       # (D, D)

        row = lax.broadcasted_iota(jnp.int32, (d, d), 0)
        col = lax.broadcasted_iota(jnp.int32, (d, d), 1)
        diag = jnp.sum(jnp.where(row == col, c, 0.0),
                       axis=0, keepdims=True)                      # (1, D)

        total_sq = jnp.sum(c * c)
        diag_sq = jnp.sum(diag * diag)
        on_diag = jnp.sum((diag - 1.0) ** 2) / d
        off_denom = float(d * (d - 1)) if d > 1 else 1.0
        off_diag = (total_sq - diag_sq) / off_denom
        loss_ref[0, 0] = on_diag + 0.005 * off_diag


# --------------------------------------------------------------------------
# Wrapper
# --------------------------------------------------------------------------
def prompt_forward(prompt, x_embed, top_k):
    """prompt: (pool_size, length, embed_dim) f32; x_embed: (batch, embed_dim) f32."""
    pool_size, length, embed_dim = prompt.shape
    batch = x_embed.shape[0]
    vmem = pl.BlockSpec(memory_space=pltpu.MemorySpace.VMEM)

    similarity, prompt_norm, x_embed_norm = pl.pallas_call(
        _sim_kernel,
        out_shape=(
            jax.ShapeDtypeStruct((batch, pool_size), jnp.float32),
            jax.ShapeDtypeStruct((pool_size, embed_dim), jnp.float32),
            jax.ShapeDtypeStruct((batch, embed_dim), jnp.float32),
        ),
        in_specs=[vmem, vmem],
        out_specs=(vmem, vmem, vmem),
    )(x_embed, prompt)

    # top-k selection + data-dependent gathers: plain JAX glue
    sim_vals, idx = lax.top_k(similarity, top_k)          # (B, K)
    batched_prompt_raw = jnp.take(prompt, idx, axis=0)    # (B, K, L, D)
    batched_prompt = batched_prompt_raw.reshape(batch, top_k * length, embed_dim)
    batched_key_norm = jnp.take(prompt_norm, idx, axis=0)  # (B, K, D)

    # reduce_sim == sum_{b,k,d} prompt_norm[idx[b,k],d] * x_embed_norm[b,d]
    #            == sum of the selected (top-k) similarity entries
    reduce_sim = jnp.sum(sim_vals) / batch

    # --- streamed correlation loss over f = batched_prompt flattened on rows ---
    n_rows = batch * top_k * length
    tile_n = _CORR_TILE_ROWS if n_rows >= _CORR_TILE_ROWS else _round_up(n_rows, 8)
    n_pad = _round_up(n_rows, tile_n)
    f_flat = batched_prompt.reshape(n_rows, embed_dim)
    if n_pad != n_rows:
        # zero rows contribute nothing to Gram / column moments
        f_flat = jnp.pad(f_flat, ((0, n_pad - n_rows), (0, 0)))

    corr_loss = pl.pallas_call(
        functools.partial(_corr_kernel, n_rows=n_rows, d=embed_dim),
        out_shape=jax.ShapeDtypeStruct((1, 1), jnp.float32),
        grid_spec=pltpu.PrefetchScalarGridSpec(
            num_scalar_prefetch=0,
            grid=(n_pad // tile_n,),
            in_specs=[pl.BlockSpec((tile_n, embed_dim), lambda i: (i, 0))],
            out_specs=pl.BlockSpec((1, 1), lambda i: (0, 0),
                                   memory_space=pltpu.MemorySpace.SMEM),
            scratch_shapes=[
                pltpu.VMEM((embed_dim, embed_dim), jnp.float32),  # Gram accumulator
                pltpu.VMEM((1, embed_dim), jnp.float32),          # column sum
                pltpu.VMEM((1, embed_dim), jnp.float32),          # column sum of squares
            ]),
        compiler_params=pltpu.CompilerParams(
            dimension_semantics=("arbitrary",)),
    )(f_flat)[0, 0]

    out = {
        'prompt_idx': idx,
        'prompt_norm': prompt_norm,
        'x_embed_norm': x_embed_norm,
        'similarity': similarity,
        'selected_key': batched_key_norm,
        'reduce_sim': reduce_sim,
        'corr_loss': corr_loss,
        'total_prompt_len': top_k * length,
        'prompted_embedding': batched_prompt,
    }
    return out


# --------------------------------------------------------------------------
# Pure-JAX reference (mirrors the PyTorch module) for correctness checking.
# --------------------------------------------------------------------------
def _reference(prompt, x_embed, top_k):
    pkey = prompt.mean(axis=1)
    pnorm = pkey * lax.rsqrt(jnp.maximum(jnp.sum(pkey * pkey, 1, keepdims=True), EPS_L2))
    xnorm = x_embed * lax.rsqrt(
        jnp.maximum(jnp.sum(x_embed * x_embed, 1, keepdims=True), EPS_L2))
    sim = xnorm @ pnorm.T
    _, idx = lax.top_k(sim, top_k)
    bp = jnp.take(prompt, idx, axis=0).reshape(x_embed.shape[0], -1, prompt.shape[-1])
    key_n = jnp.take(pnorm, idx, axis=0)
    reduce_sim = jnp.sum(key_n * xnorm[:, None, :]) / x_embed.shape[0]
    f = bp.reshape(-1, bp.shape[-1])
    n, d = f.shape
    mu = f.mean(0)
    var = jnp.sum((f - mu) ** 2, axis=0) / (n - 1)
    fn = (f - mu) / (jnp.sqrt(var) + 1e-6)
    c = fn.T @ fn / n
    diag = jnp.diagonal(c)
    on = jnp.mean((diag - 1.0) ** 2)
    off = (jnp.sum(c * c) - jnp.sum(diag * diag)) / (d * (d - 1))
    return sim, reduce_sim, on + 0.005 * off


if __name__ == "__main__":
    # Small, lane-dense shapes consistent with the module's semantics.
    pool_size, length, embed_dim, top_k, batch = 16, 5, 128, 3, 8

    key = jax.random.PRNGKey(0)
    k_prompt, k_x = jax.random.split(key)
    # nn.init.uniform_(self.prompt, -1, 1)
    prompt = jax.random.uniform(k_prompt, (pool_size, length, embed_dim),
                                minval=-1.0, maxval=1.0, dtype=jnp.float32)
    x_embed = jax.random.normal(k_x, (batch, embed_dim), dtype=jnp.float32)

    out = prompt_forward(prompt, x_embed, top_k)
    jax.block_until_ready(out)

    assert out['prompted_embedding'].shape == (batch, top_k * length, embed_dim)
    assert out['similarity'].shape == (batch, pool_size)
    assert out['prompt_idx'].shape == (batch, top_k)
    assert out['selected_key'].shape == (batch, top_k, embed_dim)

    sim_ref, rsim_ref, corr_ref = _reference(prompt, x_embed, top_k)
    np.testing.assert_allclose(np.asarray(out['similarity']), np.asarray(sim_ref),
                               rtol=2e-3, atol=2e-4)
    np.testing.assert_allclose(float(out['reduce_sim']), float(rsim_ref),
                               rtol=2e-3, atol=2e-4)
    np.testing.assert_allclose(float(out['corr_loss']), float(corr_ref),
                               rtol=5e-3, atol=5e-4)

    print("KERNEL_OK")
</pallas_src>

<mosaic_0001>
module attributes {stable_mosaic.version = 11 : i64} {
  func.func @_sim_kernel(%arg0: memref<8x128xf32, #tpu.memory_space<vmem>>, %arg1: memref<16x5x128xf32, #tpu.memory_space<vmem>>, %arg2: memref<8x16xf32, #tpu.memory_space<vmem>>, %arg3: memref<16x128xf32, #tpu.memory_space<vmem>>, %arg4: memref<8x128xf32, #tpu.memory_space<vmem>>) attributes {dimension_semantics = [], scalar_prefetch = 0 : i64, scratch_operands = 0 : i64, tpu.core_type = #tpu.core_type<tc>} {
    %c0 = arith.constant 0 : index
    %c0_0 = arith.constant 0 : index
    %0 = vector.load %arg0[%c0, %c0_0] : memref<8x128xf32, #tpu.memory_space<vmem>>, vector<8x128xf32>
    %c0_1 = arith.constant 0 : index
    %c0_2 = arith.constant 0 : index
    %c0_3 = arith.constant 0 : index
    %1 = vector.load %arg1[%c0_1, %c0_2, %c0_3] : memref<16x5x128xf32, #tpu.memory_space<vmem>>, vector<16x5x128xf32>
    %cst = arith.constant dense<0.000000e+00> : vector<16x128xf32>
    %2 = vector.multi_reduction <add>, %1, %cst [1] : vector<16x5x128xf32> to vector<16x128xf32>
    %cst_4 = arith.constant 5.000000e+00 : f32
    %3 = vector.broadcast %cst_4 : f32 to vector<16x128xf32>
    %4 = arith.divf %2, %3 : vector<16x128xf32>
    %5 = arith.mulf %4, %4 : vector<16x128xf32>
    %cst_5 = arith.constant dense<0.000000e+00> : vector<16xf32>
    %6 = vector.multi_reduction <add>, %5, %cst_5 [1] : vector<16x128xf32> to vector<16xf32>
    %7 = vector.shape_cast %6 : vector<16xf32> to vector<16x1xf32>
    %cst_6 = arith.constant 9.99999996E-13 : f32
    %8 = vector.broadcast %cst_6 : f32 to vector<16x1xf32>
    %9 = arith.maximumf %7, %8 : vector<16x1xf32>
    %10 = math.rsqrt %9 : vector<16x1xf32>
    %11 = vector.broadcast %10 : vector<16x1xf32> to vector<16x128xf32>
    %12 = arith.mulf %4, %11 : vector<16x128xf32>
    %13 = arith.mulf %0, %0 : vector<8x128xf32>
    %cst_7 = arith.constant dense<0.000000e+00> : vector<8xf32>
    %14 = vector.multi_reduction <add>, %13, %cst_7 [1] : vector<8x128xf32> to vector<8xf32>
    %15 = vector.shape_cast %14 : vector<8xf32> to vector<8x1xf32>
    %cst_8 = arith.constant 9.99999996E-13 : f32
    %16 = vector.broadcast %cst_8 : f32 to vector<8x1xf32>
    %17 = arith.maximumf %15, %16 : vector<8x1xf32>
    %18 = math.rsqrt %17 : vector<8x1xf32>
    %19 = vector.broadcast %18 : vector<8x1xf32> to vector<8x128xf32>
    %20 = arith.mulf %0, %19 : vector<8x128xf32>
    %cst_9 = arith.constant dense<0.000000e+00> : vector<8x16xf32>
    %21 = tpu.matmul %20, %12, %cst_9 {dimension_numbers = #tpu.dot_dimension_numbers<[1], [1], [0], [0], [0, 0, 1, 0], [], []>} : vector<8x128xf32>, vector<16x128xf32>, vector<8x16xf32> -> vector<8x16xf32>
    %c0_10 = arith.constant 0 : index
    %c0_11 = arith.constant 0 : index
    %22 = vector.load %arg2[%c0_10, %c0_11] : memref<8x16xf32, #tpu.memory_space<vmem>>, vector<8x16xf32>
    tpu.vector_store %arg2[%c0_10, %c0_11], %21 {strides = array<i32>} : memref<8x16xf32, #tpu.memory_space<vmem>>, vector<8x16xf32>,
    %c0_12 = arith.constant 0 : index
    %c0_13 = arith.constant 0 : index
    %23 = vector.load %arg3[%c0_12, %c0_13] : memref<16x128xf32, #tpu.memory_space<vmem>>, vector<16x128xf32>
    tpu.vector_store %arg3[%c0_12, %c0_13], %12 {strides = array<i32>} : memref<16x128xf32, #tpu.memory_space<vmem>>, vector<16x128xf32>,
    %c0_14 = arith.constant 0 : index
    %c0_15 = arith.constant 0 : index
    %24 = vector.load %arg4[%c0_14, %c0_15] : memref<8x128xf32, #tpu.memory_space<vmem>>, vector<8x128xf32>
    tpu.vector_store %arg4[%c0_14, %c0_15], %20 {strides = array<i32>} : memref<8x128xf32, #tpu.memory_space<vmem>>, vector<8x128xf32>,
    return
  }
}

</mosaic_0001>

<llo_original>
// kernel: tpu_custom_call.1
$region0: #{tpu_custom_call.1}
  #allocation0 [shape = 'u32[]', space=smem, size = 0x4, offset = 0x4, fixed_abs, tag = 'smem constant byte address 0x4 - core index']
  #allocation1 [shape = 'u32[144,128]{1,0:T(1,128)}', space=vmem, size = 0x12000, scoped, tag = 'internal scratch']
  %s0 = inlined_call_operand.vmem [shape: f32[8,128], index: 0, kind: input, shape index: {}]
  %s1 = inlined_call_operand.vmem [shape: f32[16,5,128], index: 1, kind: input, shape index: {}]
  %s2 = inlined_call_operand.hbm [shape: f32[8,16], index: 2, kind: output, shape index: {0}]
  %s3 = inlined_call_operand.hbm [shape: f32[16,128], index: 3, kind: output, shape index: {1}]
  %s4 = inlined_call_operand.hbm [shape: f32[8,128], index: 4, kind: output, shape index: {2}]
  %5 = xla_tuple %s2, %s3, %s4
  %s6 = sld [smem:[#allocation0]]
  $region34: #{tpu_custom_call.1} parent=0
    _
  %s8 = ssub.s32 1, %s6
  %s9 = scalar_select 0, %s8, %s6
  $region1: #{tpu_custom_call.1} parent=0
    #allocation2 [shape = 'u8[4096]{0}', space=vmem, size = 0x1000, scoped, tag = 'output window, operand 0, single buffered']
    #allocation3 [shape = 's32[1]{0}', space=sflag, size = 0x4, scoped, tag = 'scoped memory for tpu_custom_call.1']
    #allocation4 [shape = 'u8[8192]{0}', space=vmem, size = 0x2000, scoped, tag = 'output window, operand 1, single buffered']
    #allocation5 [shape = 's32[1]{0}', space=sflag, size = 0x4, scoped, tag = 'scoped memory for tpu_custom_call.1']
    #allocation6 [shape = 'u8[4096]{0}', space=vmem, size = 0x1000, scoped, tag = 'output window, operand 2, single buffered']
    %10 = vsyncpa [#allocation3], 0
    %11 = vsyncpa [#allocation5], 0
    // Predicated region
    $region2: #{tpu_custom_call.1} parent=1 // pred_check
      _
    $region3: #{tpu_custom_call.1} parent=1 // pred_check_branch
      %13 = sbr.rel (0) target = $region5
    $region4: #{tpu_custom_call.1} parent=1 // pred_region
      _
    $region5: #{tpu_custom_call.1} parent=1 // pred_fallthru
      _
    // Predicated region
    $region6: #{tpu_custom_call.1} parent=1 // pred_check
      _
    $region7: #{tpu_custom_call.1} parent=1 // pred_check_branch
      %15 = sbr.rel (0) target = $region9
    $region8: #{tpu_custom_call.1} parent=1 // pred_region
      _
    $region9: #{tpu_custom_call.1} parent=1 // pred_fallthru
      _
    %v16 = vld [vmem:[%s0] sm:$0xff]
    %v17 = vld [vmem:[%s1] sm:$0x1f]
    %v18 = vld [vmem:[%s1 + $0x8] sm:$0x1f]
    %v19 = vld [vmem:[%s1 + $0x10] sm:$0x1f]
    %v20 = vld [vmem:[%s1 + $0x18] sm:$0x1f]
    %v21 = vld [vmem:[%s1 + $0x20] sm:$0x1f]
    %v22 = vld [vmem:[%s1 + $0x28] sm:$0x1f]
    %v23 = vld [vmem:[%s1 + $0x30] sm:$0x1f]
    %v24 = vld [vmem:[%s1 + $0x38] sm:$0x1f]
    %v25 = vld [vmem:[%s1 + $0x40] sm:$0x1f]
    %v26 = vld [vmem:[%s1 + $0x48] sm:$0x1f]
    %v27 = vld [vmem:[%s1 + $0x50] sm:$0x1f]
    %v28 = vld [vmem:[%s1 + $0x58] sm:$0x1f]
    %v29 = vld [vmem:[%s1 + $0x60] sm:$0x1f]
    %v30 = vld [vmem:[%s1 + $0x68] sm:$0x1f]
    %v31 = vld [vmem:[%s1 + $0x70] sm:$0x1f]
    %v32 = vld [vmem:[%s1 + $0x78] sm:$0x1f]
    %vm33 = vcmask 1044480
    %v34 = vsel %vm33, %v17, 0.0
    %v35 = vrot.slane %v34, 4
    %v36 = vadd.f32 %v34, %v35
    %v37 = vrot.slane %v36, 2
    %v38 = vadd.f32 %v36, %v37
    %v39 = vrot.slane %v38, 1
    %v40 = vadd.f32 %v38, %v39
    %v41 = vsel %vm33, %v18, 0.0
    %v42 = vrot.slane %v41, 4
    %v43 = vadd.f32 %v41, %v42
    %v44 = vrot.slane %v43, 2
    %v45 = vadd.f32 %v43, %v44
    %v46 = vrot.slane %v45, 1
    %v47 = vadd.f32 %v45, %v46
    %v48 = vsel %vm33, %v19, 0.0
    %v49 = vrot.slane %v48, 4
    %v50 = vadd.f32 %v48, %v49
    %v51 = vrot.slane %v50, 2
    %v52 = vadd.f32 %v50, %v51
    %v53 = vrot.slane %v52, 1
    %v54 = vadd.f32 %v52, %v53
    %v55 = vsel %vm33, %v20, 0.0
    %v56 = vrot.slane %v55, 4
    %v57 = vadd.f32 %v55, %v56
    %v58 = vrot.slane %v57, 2
    %v59 = vadd.f32 %v57, %v58
    %v60 = vrot.slane %v59, 1
    %v61 = vadd.f32 %v59, %v60
    %v62 = vsel %vm33, %v21, 0.0
    %v63 = vrot.slane %v62, 4
    %v64 = vadd.f32 %v62, %v63
    %v65 = vrot.slane %v64, 2
    %v66 = vadd.f32 %v64, %v65
    %v67 = vrot.slane %v66, 1
    %v68 = vadd.f32 %v66, %v67
    %v69 = vsel %vm33, %v22, 0.0
    %v70 = vrot.slane %v69, 4
    %v71 = vadd.f32 %v69, %v70
    %v72 = vrot.slane %v71, 2
    %v73 = vadd.f32 %v71, %v72
    %v74 = vrot.slane %v73, 1
    %v75 = vadd.f32 %v73, %v74
    %v76 = vsel %vm33, %v23, 0.0
    %v77 = vrot.slane %v76, 4
    %v78 = vadd.f32 %v76, %v77
    %v79 = vrot.slane %v78, 2
    %v80 = vadd.f32 %v78, %v79
    %v81 = vrot.slane %v80, 1
    %v82 = vadd.f32 %v80, %v81
    %v83 = vsel %vm33, %v24, 0.0
    %v84 = vrot.slane %v83, 4
    %v85 = vadd.f32 %v83, %v84
    %v86 = vrot.slane %v85, 2
    %v87 = vadd.f32 %v85, %v86
    %v88 = vrot.slane %v87, 1
    %v89 = vadd.f32 %v87, %v88
    %v90 = vsel %vm33, %v25, 0.0
    %v91 = vrot.slane %v90, 4
    %v92 = vadd.f32 %v90, %v91
    %v93 = vrot.slane %v92, 2
    %v94 = vadd.f32 %v92, %v93
    %v95 = vrot.slane %v94, 1
    %v96 = vadd.f32 %v94, %v95
    %v97 = vsel %vm33, %v26, 0.0
    %v98 = vrot.slane %v97, 4
    %v99 = vadd.f32 %v97, %v98
    %v100 = vrot.slane %v99, 2
    %v101 = vadd.f32 %v99, %v100
    %v102 = vrot.slane %v101, 1
    %v103 = vadd.f32 %v101, %v102
    %v104 = vsel %vm33, %v27, 0.0
    %v105 = vrot.slane %v104, 4
    %v106 = vadd.f32 %v104, %v105
    %v107 = vrot.slane %v106, 2
    %v108 = vadd.f32 %v106, %v107
    %v109 = vrot.slane %v108, 1
    %v110 = vadd.f32 %v108, %v109
    %v111 = vsel %vm33, %v28, 0.0
    %v112 = vrot.slane %v111, 4
    %v113 = vadd.f32 %v111, %v112
    %v114 = vrot.slane %v113, 2
    %v115 = vadd.f32 %v113, %v114
    %v116 = vrot.slane %v115, 1
    %v117 = vadd.f32 %v115, %v116
    %v118 = vsel %vm33, %v29, 0.0
    %v119 = vrot.slane %v118, 4
    %v120 = vadd.f32 %v118, %v119
    %v121 = vrot.slane %v120, 2
    %v122 = vadd.f32 %v120, %v121
    %v123 = vrot.slane %v122, 1
    %v124 = vadd.f32 %v122, %v123
    %v125 = vsel %vm33, %v30, 0.0
    %v126 = vrot.slane %v125, 4
    %v127 = vadd.f32 %v125, %v126
    %v128 = vrot.slane %v127, 2
    %v129 = vadd.f32 %v127, %v128
    %v130 = vrot.slane %v129, 1
    %v131 = vadd.f32 %v129, %v130
    %v132 = vsel %vm33, %v31, 0.0
    %v133 = vrot.slane %v132, 4
    %v134 = vadd.f32 %v132, %v133
    %v135 = vrot.slane %v134, 2
    %v136 = vadd.f32 %v134, %v135
    %v137 = vrot.slane %v136, 1
    %v138 = vadd.f32 %v136, %v137
    %v139 = vsel %vm33, %v32, 0.0
    %v140 = vrot.slane %v139, 4
    %v141 = vadd.f32 %v139, %v140
    %v142 = vrot.slane %v141, 2
    %v143 = vadd.f32 %v141, %v142
    %v144 = vrot.slane %v143, 1
    %v145 = vadd.f32 %v143, %v144
    %v146 = vrcp.pop 5.0
    %v147 = vmul.f32 %v40, %v146
    %v148 = vmul.f32 %v47, %v146
    %v149 = vmul.f32 %v54, %v146
    %v150 = vmul.f32 %v61, %v146
    %v151 = vmul.f32 %v68, %v146
    %v152 = vmul.f32 %v75, %v146
    %v153 = vmul.f32 %v82, %v146
    %v154 = vmul.f32 %v89, %v146
    %v155 = vmul.f32 %v96, %v146
    %v156 = vmul.f32 %v103, %v146
    %v157 = vmul.f32 %v110, %v146
    %v158 = vmul.f32 %v117, %v146
    %v159 = vmul.f32 %v124, %v146
    %v160 = vmul.f32 %v131, %v146
    %v161 = vmul.f32 %v138, %v146
    %v162 = vmul.f32 %v145, %v146
    %v163 = vmul.f32 %v147, %v147
    %v164 = vmul.f32 %v148, %v148
    %v165 = vmul.f32 %v149, %v149
    %v166 = vmul.f32 %v150, %v150
    %v167 = vmul.f32 %v151, %v151
    %v168 = vmul.f32 %v152, %v152
    %v169 = vmul.f32 %v153, %v153
    %v170 = vmul.f32 %v154, %v154
    %v171 = vmul.f32 %v155, %v155
    %v172 = vmul.f32 %v156, %v156
    %v173 = vmul.f32 %v157, %v157
    %v174 = vmul.f32 %v158, %v158
    %v175 = vmul.f32 %v159, %v159
    %v176 = vmul.f32 %v160, %v160
    %v177 = vmul.f32 %v161, %v161
    %v178 = vmul.f32 %v162, %v162
    %vm195 = vcmask 1041409
    %v196 = vsel %vm195, %v164, %v163
    %vm197 = vcmask 1042434
    %v198 = vsel %vm197, %v165, %v196
    %vm199 = vcmask 1043459
    %v200 = vsel %vm199, %v166, %v198
    %vm201 = vcmask 1044484
    %v202 = vsel %vm201, %v167, %v200
    %vm203 = vcmask 1045509
    %v204 = vsel %vm203, %v168, %v202
    %vm205 = vcmask 1046534
    %v206 = vsel %vm205, %v169, %v204
    %vm207 = vcmask 1047559
    %v208 = vsel %vm207, %v170, %v206
    %v209 = vsel %vm195, %v172, %v171
    %v210 = vsel %vm197, %v173, %v209
    %v211 = vsel %vm199, %v174, %v210
    %v212 = vsel %vm201, %v175, %v211
    %v213 = vsel %vm203, %v176, %v212
    %v214 = vsel %vm205, %v177, %v213
    %v215 = vsel %vm207, %v178, %v214
    %218 = vadd.xlane.f32.xlu0 %v208
    %v219 = vpop.xlane.xlu0 %218
    %220 = vadd.xlane.f32.xlu0 %v215
    %v221 = vpop.xlane.xlu0 %220
    %v222 = vmax.f32 %v219, 1e-12
    %v223 = vmax.f32 %v221, 1e-12
    %v224 = vrsqrt.pop %v222
    %v225 = vrsqrt.pop %v223
    %v228 = vrot.slane %v224, 1
    %v229 = vrot.slane %v224, 2
    %v230 = vrot.slane %v224, 3
    %v231 = vrot.slane %v224, 4
    %v232 = vrot.slane %v224, 5
    %v233 = vrot.slane %v224, 6
    %v234 = vrot.slane %v224, 7
    %v235 = vrot.slane %v225, 1
    %v236 = vrot.slane %v225, 2
    %v237 = vrot.slane %v225, 3
    %v238 = vrot.slane %v225, 4
    %v239 = vrot.slane %v225, 5
    %v240 = vrot.slane %v225, 6
    %v241 = vrot.slane %v225, 7
    %v258 = vmul.f32 %v147, %v224
    %v259 = vmul.f32 %v148, %v228
    %v260 = vmul.f32 %v149, %v229
    %v261 = vmul.f32 %v150, %v230
    %v262 = vmul.f32 %v151, %v231
    %v263 = vmul.f32 %v152, %v232
    %v264 = vmul.f32 %v153, %v233
    %v265 = vmul.f32 %v154, %v234
    %v266 = vmul.f32 %v155, %v225
    %v267 = vmul.f32 %v156, %v235
    %v268 = vmul.f32 %v157, %v236
    %v269 = vmul.f32 %v158, %v237
    %v270 = vmul.f32 %v159, %v238
    %v271 = vmul.f32 %v160, %v239
    %v272 = vmul.f32 %v161, %v240
    %v273 = vmul.f32 %v162, %v241
    %v274 = vmul.f32 %v16, %v16
    %275 = vadd.xlane.f32.xlu0 %v274
    %v276 = vpop.xlane.xlu0 %275
    %v277 = vmax.f32 %v276, 1e-12
    %v278 = vrsqrt.pop %v277
    %v279 = vmul.f32 %v16, %v278
    %v296 = vrot.slane %v259, 7
    %v297 = vsel %vm195, %v296, %v258
    %v298 = vrot.slane %v260, 6
    %v299 = vsel %vm197, %v298, %v297
    %v300 = vrot.slane %v261, 5
    %v301 = vsel %vm199, %v300, %v299
    %v302 = vrot.slane %v262, 4
    %v303 = vsel %vm201, %v302, %v301
    %v304 = vrot.slane %v263, 3
    %v305 = vsel %vm203, %v304, %v303
    %v306 = vrot.slane %v264, 2
    %v307 = vsel %vm205, %v306, %v305
    %v308 = vrot.slane %v265, 1
    %v309 = vsel %vm207, %v308, %v307
    %v310 = vrot.slane %v267, 7
    %v311 = vsel %vm195, %v310, %v266
    %v312 = vrot.slane %v268, 6
    %v313 = vsel %vm197, %v312, %v311
    %v314 = vrot.slane %v269, 5
    %v315 = vsel %vm199, %v314, %v313
    %v316 = vrot.slane %v270, 4
    %v317 = vsel %vm201, %v316, %v315
    %v318 = vrot.slane %v271, 3
    %v319 = vsel %vm203, %v318, %v317
    %v320 = vrot.slane %v272, 2
    %v321 = vsel %vm205, %v320, %v319
    %v322 = vrot.slane %v273, 1
    %v323 = vsel %vm207, %v322, %v321
    %326 = vmatprep.subr.mxu0 0.0
    %327 = vmatpush1.xpose.msra.mxu0 %v309
    %328 = vmatprep.subr.mxu0 0.0
    %329 = vmatpush1.xpose.msra.mxu0 %v323
    %330 = vmatprep.subr.mxu0 0.0
    %331 = vmatpush1.xpose.msra.mxu0 0.0
    %332 = vmatprep.subr.mxu0 0.0
    %333 = vmatpush1.xpose.msra.mxu0 0.0
    %334 = vmatprep.subr.mxu0 0.0
    %335 = vmatpush1.xpose.msra.mxu0 0.0
    %336 = vmatprep.subr.mxu0 0.0
    %337 = vmatpush1.xpose.msra.mxu0 0.0
    %338 = vmatprep.subr.mxu0 0.0
    %339 = vmatpush1.xpose.msra.mxu0 0.0
    %340 = vmatprep.subr.mxu0 0.0
    %341 = vmatpush1.xpose.msra.mxu0 0.0
    %342 = vmatprep.subr.mxu0 0.0
    %343 = vmatpush1.xpose.msra.mxu0 0.0
    %344 = vmatprep.subr.mxu0 0.0
    %345 = vmatpush1.xpose.msra.mxu0 0.0
    %346 = vmatprep.subr.mxu0 0.0
    %347 = vmatpush1.xpose.msra.mxu0 0.0
    %348 = vmatprep.subr.mxu0 0.0
    %349 = vmatpush1.xpose.msra.mxu0 0.0
    %350 = vmatprep.subr.mxu0 0.0
    %351 = vmatpush1.xpose.msra.mxu0 0.0
    %352 = vmatprep.subr.mxu0 0.0
    %353 = vmatpush1.xpose.msra.mxu0 0.0
    %354 = vmatprep.subr.mxu0 0.0
    %355 = vmatpush1.xpose.msra.mxu0 0.0
    %356 = vmatprep.subr.mxu0 0.0
    %357 = vmatpush1.xpose.msra.mxu0 0.0
    %358 = vmatprep.subr.mxu0 0.0
    %359 = vmatpush1.xpose.msra.mxu0 0.0
    %360 = vmatprep.subr.mxu0 0.0
    %361 = vmatpush1.xpose.msra.mxu0 0.0
    %362 = vmatprep.subr.mxu0 0.0
    %363 = vmatpush1.xpose.msra.mxu0 0.0
    %364 = vmatprep.subr.mxu0 0.0
    %365 = vmatpush1.xpose.msra.mxu0 0.0
    %366 = vmatprep.subr.mxu0 0.0
    %367 = vmatpush1.xpose.msra.mxu0 0.0
    %368 = vmatprep.subr.mxu0 0.0
    %369 = vmatpush1.xpose.msra.mxu0 0.0
    %370 = vmatprep.subr.mxu0 0.0
    %371 = vmatpush1.xpose.msra.mxu0 0.0
    %372 = vmatprep.subr.mxu0 0.0
    %373 = vmatpush1.xpose.msra.mxu0 0.0
    %374 = vmatprep.subr.mxu0 0.0
    %375 = vmatpush1.xpose.msra.mxu0 0.0
    %376 = vmatprep.subr.mxu0 0.0
    %377 = vmatpush1.xpose.msra.mxu0 0.0
    %378 = vmatprep.subr.mxu0 0.0
    %379 = vmatpush1.xpose.msra.mxu0 0.0
    %380 = vmatprep.subr.mxu0 0.0
    %381 = vmatpush1.xpose.msra.mxu0 0.0
    %382 = vmatprep.subr.mxu0 0.0
    %383 = vmatpush1.xpose.msra.mxu0 0.0
    %384 = vmatprep.subr.mxu0 0.0
    %385 = vmatpush1.xpose.msra.mxu0 0.0
    %386 = vmatprep.subr.mxu0 0.0
    %387 = vmatpush1.xpose.msra.mxu0 0.0
    %388 = vmatprep.subr.mxu0 0.0
    %389 = vmatpush1.xpose.msra.mxu0 0.0
    %390 = vmatprep.mubr.f32.mxu0 0.0
    %391 = vmatmul.mubr.f32.gmra.mrb[0].mxu0 %v279
    %v392 = vpop.f32.mrb[0].mxu0
    %v393 = vadd.f32 0.0, %v392
    %v394 = vpop.f32.mrb[0].mxu0
    %395 = vdwg.mxu0
    %vm396 = vcmask 130048
    %397 = vst.msk [vmem:[#allocation2] sm:$0xff] %vm396, %v393
    %398 = vst [vmem:[#allocation4] sm:$0xff] %v309
    %399 = vst [vmem:[#allocation4 + $0x8] sm:$0xff] %v323
    %400 = vst [vmem:[#allocation6] sm:$0xff] %v279
    // Predicated region
    $region10: #{tpu_custom_call.1} parent=1 // pred_check
      _
    $region11: #{tpu_custom_call.1} parent=1 // pred_check_branch
      %402 = sbr.rel (0) target = $region13
    $region12: #{tpu_custom_call.1} parent=1 // pred_region
      %s404 = ssub.s32 128, 128
      %405 = vsyncadd [#allocation3], %s404
      %s407 = sshll.u32 [#allocation2], 4
      %s408 = int_to_ptr.vmem [resolvable:$true] %s407
      %410 = dma.vmem_to_hbm [thread:$0]  %s408, 128, %s2, [#allocation3]
    $region13: #{tpu_custom_call.1} parent=1 // pred_fallthru
      _
    // Predicated region
    $region14: #{tpu_custom_call.1} parent=1 // pred_check
      _
    $region15: #{tpu_custom_call.1} parent=1 // pred_check_branch
      %412 = sbr.rel (0) target = $region17
    $region16: #{tpu_custom_call.1} parent=1 // pred_region
      %s414 = ssub.s32 256, 256
      %415 = vsyncadd [#allocation5], %s414
      %s416 = sshll.u32 [#allocation4], 4
      %s417 = int_to_ptr.vmem [resolvable:$true] %s416
      %422 = dma.vmem_to_hbm [thread:$0]  %s417, 256, %s3, [#allocation5], 128, 128, 8
    $region17: #{tpu_custom_call.1} parent=1 // pred_fallthru
      _
    // Predicated region
    $region18: #{tpu_custom_call.1} parent=1 // pred_check
      _
    $region19: #{tpu_custom_call.1} parent=1 // pred_check_branch
      %424 = sbr.rel (0) target = $region21
    $region20: #{tpu_custom_call.1} parent=1 // pred_region
      %s426 = ssub.s32 128, 128
      %427 = vsyncadd [#allocation5], %s426
      %s429 = sshll.u32 [#allocation6], 4
      %s430 = int_to_ptr.vmem [resolvable:$true] %s429
      %432 = dma.vmem_to_hbm [thread:$0]  %s430, 128, %s4, [#allocation5]
    $region21: #{tpu_custom_call.1} parent=1 // pred_fallthru
      _
    // Predicated region
    $region22: #{tpu_custom_call.1} parent=1 // pred_check
      _
    $region23: #{tpu_custom_call.1} parent=1 // pred_check_branch
      %434 = sbr.rel (0) target = $region25
    $region24: #{tpu_custom_call.1} parent=1 // pred_region
      %435 = dma.done [#allocation3], 128
    $region25: #{tpu_custom_call.1} parent=1 // pred_fallthru
      _
    // Predicated region
    $region26: #{tpu_custom_call.1} parent=1 // pred_check
      _
    $region27: #{tpu_custom_call.1} parent=1 // pred_check_branch
      %437 = sbr.rel (0) target = $region29
    $region28: #{tpu_custom_call.1} parent=1 // pred_region
      %438 = dma.done [#allocation5], 256
    $region29: #{tpu_custom_call.1} parent=1 // pred_fallthru
      _
    // Predicated region
    $region30: #{tpu_custom_call.1} parent=1 // pred_check
      _
    $region31: #{tpu_custom_call.1} parent=1 // pred_check_branch
      %440 = sbr.rel (0) target = $region33
    $region32: #{tpu_custom_call.1} parent=1 // pred_region
      %441 = dma.done [#allocation5], 128
    $region33: #{tpu_custom_call.1} parent=1 // pred_fallthru
      _
    %442 = vsyncpa [#allocation3], 1
    %443 = vsyncpa [#allocation5], 1

</llo_original>
